<compile_context>
chip_gen: v5e
topology: v5e:2x2
jax: 0.10.0
libtpu: 0.0.40
codegen_flags: <defaults>
</compile_context>

<pallas_src>
import math
import functools

import jax
import jax.numpy as jnp
from jax.experimental import pallas as pl
from jax.experimental.pallas import tpu as pltpu


# ----------------------------------------------------------------------------
# Positional-encoding table (constant buffer, built like the PyTorch __init__).
# Build it once, in the dtype you will feed the kernel, and reuse it.
# ----------------------------------------------------------------------------
def make_pe_table(d_model: int, max_len: int = 5000, dtype=jnp.float32) -> jnp.ndarray:
    assert d_model % 2 == 0, "d_model must be even (same as the PyTorch module)"
    position = jnp.arange(max_len, dtype=jnp.float32)[:, None]            # (max_len, 1)
    div_term = jnp.exp(
        jnp.arange(0, d_model, 2, dtype=jnp.float32) * (-math.log(10000.0) / d_model)
    )                                                                      # (d_model/2,)
    pe = jnp.zeros((max_len, d_model), dtype=jnp.float32)
    pe = pe.at[:, 0::2].set(jnp.sin(position * div_term))
    pe = pe.at[:, 1::2].set(jnp.cos(position * div_term))
    return pe.astype(dtype)                                                # (max_len, d_model)


# ----------------------------------------------------------------------------
# Kernels
# ----------------------------------------------------------------------------
def pe_add_kernel(x_ref, pe_ref, o_ref, *, bpb: int):
    pe = pe_ref[...]
    if bpb > 1:
        pe = jnp.tile(pe, (1, bpb))          # repeat along the lane dim (cheap, no relayout)
    o_ref[...] = x_ref[...] + pe


def pe_add_dropout_kernel(seed_ref, x_ref, pe_ref, o_ref, *,
                          bpb: int, row_stride: int, threshold: int, scale: float):
    pe = pe_ref[...]
    if bpb > 1:
        pe = jnp.tile(pe, (1, bpb))
    y = x_ref[...] + pe

    # Tiling-invariant dropout mask: hash of (seed, global element index) so the
    # mask does not depend on block size / grid shape and is reproducible.
    shp = x_ref.shape
    row0 = pl.program_id(0) * shp[0]
    col0 = pl.program_id(1) * shp[1]
    rows = jax.lax.broadcasted_iota(jnp.int32, shp, 0) + row0
    cols = jax.lax.broadcasted_iota(jnp.int32, shp, 1) + col0
    h = ((rows * row_stride + cols) ^ seed_ref[0]).astype(jnp.uint32)
    # lowbias32 integer hash (wrap-around uint32 arithmetic).
    h = (h ^ (h >> 16)) * jnp.uint32(0x7FEB352D)
    h = (h ^ (h >> 15)) * jnp.uint32(0x846CA68B)
    h = h ^ (h >> 16)

    keep = h >= jnp.uint32(threshold)        # P(keep) = 1 - p (up to 2**-32 rounding)
    o_ref[...] = jnp.where(keep, y * scale, jnp.zeros_like(y)).astype(o_ref.dtype)


# ----------------------------------------------------------------------------
# Tiling helpers
# ----------------------------------------------------------------------------
_TARGET_BLOCK_BYTES = 8 * 1024 * 1024        # ~8 MiB blocks: per-step overhead < ~5%


def _round_up(n: int, m: int) -> int:
    return -(-n // m) * m


def _choose_tiles(S: int, B: int, D: int, itemsize: int, sub: int):
    """Pick (rows per block, batches per block).

    Prefers fully contiguous row chunks (all B batches per block); only splits
    the batch/lane axis when a single row does not fit the target block size.
    """
    bpb = max(1, min(B, _TARGET_BLOCK_BYTES // max(sub * D * itemsize, 1)))
    row_chunk_bytes = bpb * D * itemsize
    ts = max(sub, (_TARGET_BLOCK_BYTES // max(row_chunk_bytes, 1)) // sub * sub)
    ts = min(S, ts)
    # v7x has 2 TensorCores sharded over the "parallel" axes: make sure the row
    # axis has >= 2 steps whenever the sequence is long enough to split.
    if S > sub and pl.cdiv(S, ts) < 2:
        ts = min(ts, _round_up((S + 1) // 2, sub))
    return ts, bpb


# ----------------------------------------------------------------------------
# Wrapper
# ----------------------------------------------------------------------------
def positional_encoding(x, pe_table, *, p: float = 0.1, training: bool = False,
                        seed: int = 0):
    """Forward of PositionalEncoding: dropout(x + pe[:S]) (dropout only when training)."""
    S, B, D = x.shape
    assert pe_table.ndim == 2 and pe_table.shape[0] >= S and pe_table.shape[1] == D

    dtype = x.dtype
    itemsize = jnp.dtype(dtype).itemsize
    sub = max(8, 32 // itemsize)             # sublane multiple: 8 f32, 16 bf16

    # Prefer a table already built in x.dtype (make_pe_table(..., dtype=...)):
    # then there is zero per-call slice/cast traffic — the BlockSpec below just
    # indexes the first S rows of the full table.
    pe_full = pe_table if pe_table.dtype == dtype else pe_table.astype(dtype)

    ts, bpb = _choose_tiles(S, B, D, itemsize, sub)
    grid = (pl.cdiv(S, ts), pl.cdiv(B, bpb))

    if ts % sub == 0:
        pe_in = pe_full                      # index rows of the full table (no slice op)
    else:
        pe_in = pe_full[:S]                  # here ts == S; (S, D) block == full dims is legal

    x_in = x.reshape(S, B * D)               # contiguous rows -> wide, unmasked DMA / vst
    blk_x = (ts, bpb * D)
    blk_pe = (ts, D)
    out_struct = jax.ShapeDtypeStruct((S, B * D), dtype)

    block_bytes = ts * bpb * D * itemsize
    pe_block_bytes = ts * D * itemsize
    # Double-buffered x-in + out + pe + headroom; capped at 48 MiB for v7x (64 MiB VMEM).
    vmem_limit = int(min(max(4 * block_bytes + 2 * pe_block_bytes + (4 << 20), 16 << 20),
                         48 << 20))

    cost = pl.CostEstimate(
        flops=(3 if training else 1) * S * B * D,
        transcendentals=0,
        bytes_accessed=2 * S * B * D * itemsize + S * D * itemsize,
    )
    cparams = pltpu.CompilerParams(
        dimension_semantics=("parallel",) * len(grid),
        vmem_limit_bytes=vmem_limit,
    )
    # Note: for very long sequences, sweeping pipeline_mode=pl.Buffered(3) on the
    # x input spec can close a few % of exposed DMA (check the v7x 64 MiB cap).

    if (not training) or p == 0.0:
        out = pl.pallas_call(
            functools.partial(pe_add_kernel, bpb=bpb),
            out_shape=out_struct,
            grid_spec=pltpu.PrefetchScalarGridSpec(
                num_scalar_prefetch=0,
                grid=grid,
                in_specs=[pl.BlockSpec(blk_x, lambda i, j: (i, j)),
                          pl.BlockSpec(blk_pe, lambda i, j: (i, 0))],
                out_specs=pl.BlockSpec(blk_x, lambda i, j: (i, j)),
            ),
            compiler_params=cparams,
            cost_estimate=cost,
        )(x_in, pe_in)
        return out.reshape(S, B, D)

    # Training mode: inverted dropout.
    # TODO(synk): the random stream differs from torch's nn.Dropout RNG (semantics
    #             match: keep-prob 1-p, inverted scaling), but it is deterministic
    #             in (seed, element index) and independent of tiling.
    assert 0.0 < p < 1.0, "dropout p must be in (0, 1) in training mode"
    threshold = min(int(p * (1 << 32)), (1 << 32) - 1)
    kern = functools.partial(pe_add_dropout_kernel, bpb=bpb, row_stride=B * D,
                             threshold=threshold, scale=1.0 / (1.0 - p))
    seed_arr = jnp.asarray([seed], dtype=jnp.int32)
    out = pl.pallas_call(
        kern,
        out_shape=out_struct,
        grid_spec=pltpu.PrefetchScalarGridSpec(
            num_scalar_prefetch=1,
            grid=grid,
            in_specs=[pl.BlockSpec(blk_x, lambda i, j, s: (i, j)),
                      pl.BlockSpec(blk_pe, lambda i, j, s: (i, 0))],
            out_specs=pl.BlockSpec(blk_x, lambda i, j, s: (i, j)),
        ),
        compiler_params=cparams,
        cost_estimate=cost,
    )(seed_arr, x_in, pe_in)
    return out.reshape(S, B, D)


# ----------------------------------------------------------------------------
# Main
# ----------------------------------------------------------------------------
if __name__ == "__main__":
    MAX_LEN = 64
    key = jax.random.PRNGKey(0)
    k1, k2, k3 = jax.random.split(key, 3)

    # Case 1: lane-dense d_model (multiple of 128).
    S, B, D = 8, 2, 128
    x = jax.random.normal(k1, (S, B, D), dtype=jnp.float32)
    pe_table = make_pe_table(D, MAX_LEN, dtype=jnp.float32)
    ref = x + pe_table[:S][:, None, :]

    # Eval mode (deterministic): x + pe[:S].
    out = jax.block_until_ready(positional_encoding(x, pe_table, p=0.1, training=False))
    assert out.shape == (S, B, D)
    assert jnp.allclose(out, ref, atol=1e-6), "eval mismatch vs reference"

    # Training mode: add + inverted dropout (counter-hash mask).
    p = 0.1
    out_tr = jax.block_until_ready(
        positional_encoding(x, pe_table, p=p, training=True, seed=1234))
    kept = out_tr != 0.0
    drop_frac = float(1.0 - jnp.mean(kept.astype(jnp.float32)))
    assert 0.0 <= drop_frac < 0.5, "dropout fraction implausible"
    assert jnp.allclose(jnp.where(kept, out_tr, 0.0),
                        jnp.where(kept, ref * (1.0 / (1.0 - p)), 0.0),
                        atol=1e-5), "training-mode kept values mismatch"

    # Case 2: multi-step row grid (S=16), full-pe-table row indexing.
    S2 = 16
    x2 = jax.random.normal(k2, (S2, B, D), dtype=jnp.float32)
    out2 = jax.block_until_ready(positional_encoding(x2, pe_table, training=False))
    assert jnp.allclose(out2, x2 + pe_table[:S2][:, None, :], atol=1e-6), "multi-step mismatch"

    # Case 3: d_model not a multiple of 128 (same unified path).
    S3, B3, D3 = 8, 2, 32
    x3 = jax.random.normal(k3, (S3, B3, D3), dtype=jnp.float32)
    pe3 = make_pe_table(D3, MAX_LEN, dtype=jnp.float32)
    out3 = jax.block_until_ready(positional_encoding(x3, pe3, training=False))
    assert jnp.allclose(out3, x3 + pe3[:S3][:, None, :], atol=1e-6), "small-D mismatch"

    print("KERNEL_OK")
</pallas_src>

<mosaic_0001>
module attributes {stable_mosaic.version = 11 : i64} {
  func.func @pe_add_kernel(%arg0: i32, %arg1: i32, %arg2: memref<8x256xf32, #tpu.memory_space<vmem>>, %arg3: memref<8x128xf32, #tpu.memory_space<vmem>>, %arg4: memref<8x256xf32, #tpu.memory_space<vmem>>) attributes {dimension_semantics = [#tpu.dimension_semantics<parallel>, #tpu.dimension_semantics<parallel>], iteration_bounds = array<i64: 1, 1>, scalar_prefetch = 0 : i64, scratch_operands = 0 : i64, tpu.core_type = #tpu.core_type<tc>, window_params = [{transform_indices = @transform_0, window_bounds = array<i64: 8, 256>}, {transform_indices = @transform_1, window_bounds = array<i64: 8, 128>}, {transform_indices = @transform_2, window_bounds = array<i64: 8, 256>}]} {
    %c0 = arith.constant 0 : index
    %c0_0 = arith.constant 0 : index
    %0 = vector.load %arg3[%c0, %c0_0] : memref<8x128xf32, #tpu.memory_space<vmem>>, vector<8x128xf32>
    %1 = tpu.concatenate %0, %0 in 1 : vector<8x128xf32>, vector<8x128xf32> -> vector<8x256xf32>
    %c0_1 = arith.constant 0 : index
    %c0_2 = arith.constant 0 : index
    %2 = vector.load %arg2[%c0_1, %c0_2] : memref<8x256xf32, #tpu.memory_space<vmem>>, vector<8x256xf32>
    %3 = arith.addf %2, %1 : vector<8x256xf32>
    %c0_3 = arith.constant 0 : index
    %c0_4 = arith.constant 0 : index
    %4 = vector.load %arg4[%c0_3, %c0_4] : memref<8x256xf32, #tpu.memory_space<vmem>>, vector<8x256xf32>
    tpu.vector_store %arg4[%c0_3, %c0_4], %3 {strides = array<i32>} : memref<8x256xf32, #tpu.memory_space<vmem>>, vector<8x256xf32>,
    return
  }
  func.func @transform_0(%arg0: i32, %arg1: i32) -> (i32, i32) {
    %c0_i32 = arith.constant 0 : i32
    return %arg0, %arg1 : i32, i32
  }
  func.func @transform_1(%arg0: i32, %arg1: i32) -> (i32, i32) {
    %c0_i32 = arith.constant 0 : i32
    %c0_i32_0 = arith.constant 0 : i32
    return %arg0, %c0_i32 : i32, i32
  }
  func.func @transform_2(%arg0: i32, %arg1: i32) -> (i32, i32) {
    %c0_i32 = arith.constant 0 : i32
    return %arg0, %arg1 : i32, i32
  }
}

</mosaic_0001>

<llo_original>
// kernel: tpu_custom_call.1
$region0: #{tpu_custom_call.1}
  #allocation0 [shape = 'u32[]', space=smem, size = 0x4, offset = 0x4, fixed_abs, tag = 'smem constant byte address 0x4 - core index']
  #allocation1 [shape = 'u32[72,128]{1,0:T(1,128)}', space=vmem, size = 0x9000, scoped, tag = 'internal scratch']
  %s0 = inlined_call_operand.hbm [shape: f32[8,256], index: 0, kind: input, shape index: {}]
  %s1 = inlined_call_operand.hbm [shape: f32[64,128], index: 1, kind: input, shape index: {}]
  %s2 = inlined_call_operand.hbm [shape: f32[8,256], index: 2, kind: output, shape index: {}]
  %s3 = sld [smem:[#allocation0]]
  $region26: #{tpu_custom_call.1} parent=0
    _
  %s5 = ssub.s32 1, %s3
  %s6 = scalar_select 0, %s5, %s3
  $region1: #{tpu_custom_call.1} parent=0
    #allocation2 [shape = 'u8[8192]{0}', space=vmem, size = 0x2000, scoped, tag = 'input window, operand 0, single buffered']
    #allocation3 [shape = 's32[1]{0}', space=sflag, size = 0x4, scoped, tag = 'scoped memory for tpu_custom_call.1']
    #allocation4 [shape = 's32[1]{0}', space=sflag, size = 0x4, scoped, tag = 'scoped memory for tpu_custom_call.1']
    #allocation5 [shape = 'u8[4096]{0}', space=vmem, size = 0x1000, scoped, tag = 'input window, operand 1, single buffered']
    #allocation6 [shape = 's32[1]{0}', space=sflag, size = 0x4, scoped, tag = 'scoped memory for tpu_custom_call.1']
    #allocation7 [shape = 'u8[8192]{0}', space=vmem, size = 0x2000, scoped, tag = 'output window, operand 0, single buffered']
    %7 = vsyncpa [#allocation3], 0
    %8 = vsyncpa [#allocation6], 0
    %9 = vsyncpa [#allocation4], 0
    // Predicated region
    $region2: #{tpu_custom_call.1} parent=1 // pred_check
      _
    $region3: #{tpu_custom_call.1} parent=1 // pred_check_branch
      %11 = sbr.rel (0) target = $region5
    $region4: #{tpu_custom_call.1} parent=1 // pred_region
      %13 = vsyncadd [#allocation3], 0
      %s15 = sshll.u32 %s0, 4
      %s16 = int_to_ptr.hbm [resolvable:$true] %s15
      %s17 = sshll.u32 [#allocation2], 4
      %s18 = int_to_ptr.vmem [resolvable:$true] %s17
      %20 = dma.hbm_to_vmem [thread:$0]  %s16, 256, %s18, [#allocation3]
    $region5: #{tpu_custom_call.1} parent=1 // pred_fallthru
      _
    // Predicated region
    $region6: #{tpu_custom_call.1} parent=1 // pred_check
      _
    $region7: #{tpu_custom_call.1} parent=1 // pred_check_branch
      %22 = sbr.rel (0) target = $region9
    $region8: #{tpu_custom_call.1} parent=1 // pred_region
      %24 = vsyncadd [#allocation6], 0
      %s26 = sshll.u32 %s1, 4
      %s27 = int_to_ptr.hbm [resolvable:$true] %s26
      %s28 = sshll.u32 [#allocation5], 4
      %s29 = int_to_ptr.vmem [resolvable:$true] %s28
      %31 = dma.hbm_to_vmem [thread:$0]  %s27, 128, %s29, [#allocation6]
    $region9: #{tpu_custom_call.1} parent=1 // pred_fallthru
      _
    // Predicated region
    $region10: #{tpu_custom_call.1} parent=1 // pred_check
      _
    $region11: #{tpu_custom_call.1} parent=1 // pred_check_branch
      %33 = sbr.rel (0) target = $region13
    $region12: #{tpu_custom_call.1} parent=1 // pred_region
      %35 = dma.done [#allocation3], 256
    $region13: #{tpu_custom_call.1} parent=1 // pred_fallthru
      _
    // Predicated region
    $region14: #{tpu_custom_call.1} parent=1 // pred_check
      _
    $region15: #{tpu_custom_call.1} parent=1 // pred_check_branch
      %37 = sbr.rel (0) target = $region17
    $region16: #{tpu_custom_call.1} parent=1 // pred_region
      %39 = dma.done [#allocation6], 128
    $region17: #{tpu_custom_call.1} parent=1 // pred_fallthru
      _
    %v40 = vld [vmem:[#allocation5] sm:$0xff]
    %v41 = vld [vmem:[#allocation2] sm:$0xff]
    %v42 = vld [vmem:[#allocation2 + $0x8] sm:$0xff]
    %v43 = vadd.f32 %v41, %v40
    %v44 = vadd.f32 %v42, %v40
    %45 = vst [vmem:[#allocation7] sm:$0xff] %v43
    %46 = vst [vmem:[#allocation7 + $0x8] sm:$0xff] %v44
    // Predicated region
    $region18: #{tpu_custom_call.1} parent=1 // pred_check
      _
    $region19: #{tpu_custom_call.1} parent=1 // pred_check_branch
      %48 = sbr.rel (0) target = $region21
    $region20: #{tpu_custom_call.1} parent=1 // pred_region
      %50 = vsyncadd [#allocation4], 0
      %s52 = sshll.u32 [#allocation7], 4
      %s53 = int_to_ptr.vmem [resolvable:$true] %s52
      %s54 = sshll.u32 %s2, 4
      %s55 = int_to_ptr.hbm [resolvable:$true] %s54
      %57 = dma.vmem_to_hbm [thread:$0]  %s53, 256, %s55, [#allocation4]
    $region21: #{tpu_custom_call.1} parent=1 // pred_fallthru
      _
    // Predicated region
    $region22: #{tpu_custom_call.1} parent=1 // pred_check
      _
    $region23: #{tpu_custom_call.1} parent=1 // pred_check_branch
      %59 = sbr.rel (0) target = $region25
    $region24: #{tpu_custom_call.1} parent=1 // pred_region
      %61 = dma.done [#allocation4], 256
    $region25: #{tpu_custom_call.1} parent=1 // pred_fallthru
      _
    %62 = vsyncpa [#allocation3], 1
    %63 = vsyncpa [#allocation6], 1
    %64 = vsyncpa [#allocation4], 1

</llo_original>
